<compile_context>
chip_gen: v5e
topology: v5e:2x2
jax: 0.10.0
libtpu: 0.0.40
codegen_flags: <defaults>
</compile_context>

<pallas_src>
import jax
import jax.numpy as jnp
from jax.experimental import pallas as pl
from jax.experimental.pallas import tpu as pltpu

STATE_DIM = 7 + 7        # 14
ACTION_DIM = 7
HIDDEN = 256
OUT_PAD = 8              # ACTION_DIM padded to 8 (full-array last dim for the block)
MAX_ACTION = 0.01        # unused in forward (kept for parity with the module)


def actor_mlp_kernel(x_ref, w1_ref, b1_ref, w2_ref, b2_ref, w3_ref, b3_ref, o_ref):
    # One batch tile per grid step; weights have constant block indices and
    # therefore stay resident in VMEM across all grid steps.
    x = x_ref[...].astype(jnp.bfloat16)
    h1 = jnp.dot(x, w1_ref[...], preferred_element_type=jnp.float32) + b1_ref[...]
    h1 = jnp.maximum(h1, 0.0).astype(jnp.bfloat16)
    h2 = jnp.dot(h1, w2_ref[...], preferred_element_type=jnp.float32) + b2_ref[...]
    h2 = jnp.maximum(h2, 0.0).astype(jnp.bfloat16)
    h3 = jnp.dot(h2, w3_ref[...], preferred_element_type=jnp.float32) + b3_ref[...]
    o_ref[...] = jnp.tanh(h3)          # f32, (tb, 8) store


def _round_up(x, m):
    return -(-x // m) * m


def _choose_batch_tile(B, batch_tile):
    """Pick a batch tile.

    Small B: one tile, rounded to a multiple of 16 (bf16 sublane packing).
    Larger B: at least 2 tiles (so the 'parallel' axis can use both v7x
    TensorCores), multiples of 256, capped at `batch_tile`.
    """
    if B <= 256:
        return _round_up(max(B, 1), 16)
    tb = min(batch_tile, _round_up(pl.cdiv(B, 2), 256))
    return max(tb, 256)


def loaded_actor_forward(state, params, *, batch_tile=1024):
    """state: (B, STATE_DIM) f32.  Returns (B, ACTION_DIM) f32."""
    w1, b1, w2, b2, w3p, b3p = params
    B = state.shape[0]

    tb = _choose_batch_tile(B, batch_tile)
    grid = (pl.cdiv(B, tb),)   # ragged last block handled by Pallas; no jnp.pad

    # Weights/biases: constant index_map -> fetched once, resident in VMEM.
    const = lambda shape: pl.BlockSpec(shape, lambda i: tuple(0 for _ in shape))

    out = pl.pallas_call(
        actor_mlp_kernel,
        out_shape=jax.ShapeDtypeStruct((B, OUT_PAD), jnp.float32),
        grid=grid,
        in_specs=[
            pl.BlockSpec((tb, STATE_DIM), lambda i: (i, 0)),
            const(w1.shape), const(b1.shape),
            const(w2.shape), const(b2.shape),
            const(w3p.shape), const(b3p.shape),
        ],
        out_specs=pl.BlockSpec((tb, OUT_PAD), lambda i: (i, 0)),
        compiler_params=pltpu.CompilerParams(
            dimension_semantics=("parallel",)),
    )(state, w1, b1, w2, b2, w3p, b3p)

    return out[:, :ACTION_DIM]


def init_params(key):
    """Deterministic synthetic init mirroring nn.Linear shapes.

    Weights stored transposed (in_features, out_features) and pre-cast to
    bf16 at init (so no convert op sits in front of every launch).  The last
    layer is pre-padded to OUT_PAD=8 columns with zeros.  Biases stay f32.
    """
    ks = jax.random.split(key, 6)

    def uniform_init(k, fan_in, shape):
        bound = 1.0 / jnp.sqrt(fan_in)
        return jax.random.uniform(k, shape, jnp.float32, -bound, bound)

    w1 = uniform_init(ks[0], STATE_DIM, (STATE_DIM, HIDDEN)).astype(jnp.bfloat16)
    b1 = uniform_init(ks[1], STATE_DIM, (1, HIDDEN))
    w2 = uniform_init(ks[2], HIDDEN, (HIDDEN, HIDDEN)).astype(jnp.bfloat16)
    b2 = uniform_init(ks[3], HIDDEN, (1, HIDDEN))
    w3 = uniform_init(ks[4], HIDDEN, (HIDDEN, ACTION_DIM))
    b3 = uniform_init(ks[5], HIDDEN, (1, ACTION_DIM))

    # Zero-pad last layer to OUT_PAD columns (padded col stays exactly 0,
    # tanh(0)=0, and the wrapper slices it off anyway).
    w3p = jnp.zeros((HIDDEN, OUT_PAD), jnp.float32).at[:, :ACTION_DIM].set(w3)
    w3p = w3p.astype(jnp.bfloat16)
    b3p = jnp.zeros((1, OUT_PAD), jnp.float32).at[:, :ACTION_DIM].set(b3)

    return (w1, b1, w2, b2, w3p, b3p)


def reference_forward_bf16(state, params):
    """Emulates the kernel's bf16-operand / f32-accumulate math in plain JAX."""
    w1, b1, w2, b2, w3p, b3p = params
    x = state.astype(jnp.bfloat16)
    h1 = jnp.dot(x, w1, preferred_element_type=jnp.float32) + b1
    h1 = jnp.maximum(h1, 0.0).astype(jnp.bfloat16)
    h2 = jnp.dot(h1, w2, preferred_element_type=jnp.float32) + b2
    h2 = jnp.maximum(h2, 0.0).astype(jnp.bfloat16)
    h3 = jnp.dot(h2, w3p, preferred_element_type=jnp.float32) + b3p
    return jnp.tanh(h3)[:, :ACTION_DIM]


def reference_forward_f32(state, params):
    """Pure f32 reference (weights upcast) for a loose sanity check."""
    w1, b1, w2, b2, w3p, b3p = params
    h1 = jnp.maximum(state @ w1.astype(jnp.float32) + b1, 0.0)
    h2 = jnp.maximum(h1 @ w2.astype(jnp.float32) + b2, 0.0)
    return jnp.tanh(h2 @ w3p.astype(jnp.float32) + b3p)[:, :ACTION_DIM]


if __name__ == "__main__":
    key = jax.random.PRNGKey(0)
    k_params, k_state = jax.random.split(key)

    params = init_params(k_params)
    batch = 8
    state = jax.random.normal(k_state, (batch, STATE_DIM), dtype=jnp.float32)

    out = loaded_actor_forward(state, params)
    out = jax.block_until_ready(out)

    assert out.shape == (batch, ACTION_DIM)

    ref_bf16 = reference_forward_bf16(state, params)
    ref_f32 = reference_forward_f32(state, params)
    assert jnp.allclose(out, ref_bf16, atol=5e-3, rtol=1e-3), \
        float(jnp.max(jnp.abs(out - ref_bf16)))
    assert jnp.allclose(out, ref_f32, atol=3e-2, rtol=0.0), \
        float(jnp.max(jnp.abs(out - ref_f32)))

    # Also exercise a ragged / multi-tile batch path once (no jnp.pad pre-copy).
    big = jax.random.normal(k_state, (300, STATE_DIM), dtype=jnp.float32)
    out_big = jax.block_until_ready(loaded_actor_forward(big, params))
    ref_big = reference_forward_bf16(big, params)
    assert out_big.shape == (300, ACTION_DIM)
    assert jnp.allclose(out_big, ref_big, atol=5e-3, rtol=1e-3), \
        float(jnp.max(jnp.abs(out_big - ref_big)))

    print("KERNEL_OK")
</pallas_src>

<mosaic_0001>
module attributes {stable_mosaic.version = 11 : i64} {
  func.func @actor_mlp_kernel(%arg0: i32, %arg1: memref<16x14xf32, #tpu.memory_space<vmem>>, %arg2: memref<14x256xbf16, #tpu.memory_space<vmem>>, %arg3: memref<1x256xf32, #tpu.memory_space<vmem>>, %arg4: memref<256x256xbf16, #tpu.memory_space<vmem>>, %arg5: memref<1x256xf32, #tpu.memory_space<vmem>>, %arg6: memref<256x8xbf16, #tpu.memory_space<vmem>>, %arg7: memref<1x8xf32, #tpu.memory_space<vmem>>, %arg8: memref<16x8xf32, #tpu.memory_space<vmem>>) attributes {dimension_semantics = [#tpu.dimension_semantics<parallel>], iteration_bounds = array<i64: 1>, scalar_prefetch = 0 : i64, scratch_operands = 0 : i64, tpu.core_type = #tpu.core_type<tc>, window_params = [{transform_indices = @transform_0, window_bounds = array<i64: 16, 14>}, {pipeline_mode = #tpu.pipeline_mode<synchronous>, transform_indices = @transform_1, window_bounds = array<i64: 14, 256>}, {pipeline_mode = #tpu.pipeline_mode<synchronous>, transform_indices = @transform_2, window_bounds = array<i64: 1, 256>}, {pipeline_mode = #tpu.pipeline_mode<synchronous>, transform_indices = @transform_3, window_bounds = array<i64: 256, 256>}, {pipeline_mode = #tpu.pipeline_mode<synchronous>, transform_indices = @transform_4, window_bounds = array<i64: 1, 256>}, {pipeline_mode = #tpu.pipeline_mode<synchronous>, transform_indices = @transform_5, window_bounds = array<i64: 256, 8>}, {pipeline_mode = #tpu.pipeline_mode<synchronous>, transform_indices = @transform_6, window_bounds = array<i64: 1, 8>}, {transform_indices = @transform_7, window_bounds = array<i64: 16, 8>}]} {
    %c0 = arith.constant 0 : index
    %c0_0 = arith.constant 0 : index
    %0 = vector.load %arg1[%c0, %c0_0] : memref<16x14xf32, #tpu.memory_space<vmem>>, vector<16x14xf32>
    %1 = arith.truncf %0 : vector<16x14xf32> to vector<16x14xbf16>
    %c0_1 = arith.constant 0 : index
    %c0_2 = arith.constant 0 : index
    %2 = vector.load %arg2[%c0_1, %c0_2] : memref<14x256xbf16, #tpu.memory_space<vmem>>, vector<14x256xbf16>
    %cst = arith.constant dense<0.000000e+00> : vector<16x256xf32>
    %3 = tpu.matmul %1, %2, %cst {dimension_numbers = #tpu.dot_dimension_numbers<[1], [0], [0], [1], [0, 0, 1, 1], [], []>} : vector<16x14xbf16>, vector<14x256xbf16>, vector<16x256xf32> -> vector<16x256xf32>
    %c0_3 = arith.constant 0 : index
    %c0_4 = arith.constant 0 : index
    %4 = vector.load %arg3[%c0_3, %c0_4] : memref<1x256xf32, #tpu.memory_space<vmem>>, vector<1x256xf32>
    %5 = vector.broadcast %4 : vector<1x256xf32> to vector<16x256xf32>
    %6 = arith.addf %3, %5 : vector<16x256xf32>
    %cst_5 = arith.constant 0.000000e+00 : f32
    %7 = vector.broadcast %cst_5 : f32 to vector<16x256xf32>
    %8 = arith.maximumf %6, %7 : vector<16x256xf32>
    %9 = arith.truncf %8 : vector<16x256xf32> to vector<16x256xbf16>
    %c0_6 = arith.constant 0 : index
    %c0_7 = arith.constant 0 : index
    %10 = vector.load %arg4[%c0_6, %c0_7] : memref<256x256xbf16, #tpu.memory_space<vmem>>, vector<256x256xbf16>
    %cst_8 = arith.constant dense<0.000000e+00> : vector<16x256xf32>
    %11 = tpu.matmul %9, %10, %cst_8 {dimension_numbers = #tpu.dot_dimension_numbers<[1], [0], [0], [1], [0, 0, 1, 1], [], []>} : vector<16x256xbf16>, vector<256x256xbf16>, vector<16x256xf32> -> vector<16x256xf32>
    %c0_9 = arith.constant 0 : index
    %c0_10 = arith.constant 0 : index
    %12 = vector.load %arg5[%c0_9, %c0_10] : memref<1x256xf32, #tpu.memory_space<vmem>>, vector<1x256xf32>
    %13 = vector.broadcast %12 : vector<1x256xf32> to vector<16x256xf32>
    %14 = arith.addf %11, %13 : vector<16x256xf32>
    %cst_11 = arith.constant 0.000000e+00 : f32
    %15 = vector.broadcast %cst_11 : f32 to vector<16x256xf32>
    %16 = arith.maximumf %14, %15 : vector<16x256xf32>
    %17 = arith.truncf %16 : vector<16x256xf32> to vector<16x256xbf16>
    %c0_12 = arith.constant 0 : index
    %c0_13 = arith.constant 0 : index
    %18 = vector.load %arg6[%c0_12, %c0_13] : memref<256x8xbf16, #tpu.memory_space<vmem>>, vector<256x8xbf16>
    %cst_14 = arith.constant dense<0.000000e+00> : vector<16x8xf32>
    %19 = tpu.matmul %17, %18, %cst_14 {dimension_numbers = #tpu.dot_dimension_numbers<[1], [0], [0], [1], [0, 0, 1, 1], [], []>} : vector<16x256xbf16>, vector<256x8xbf16>, vector<16x8xf32> -> vector<16x8xf32>
    %c0_15 = arith.constant 0 : index
    %c0_16 = arith.constant 0 : index
    %20 = vector.load %arg7[%c0_15, %c0_16] : memref<1x8xf32, #tpu.memory_space<vmem>>, vector<1x8xf32>
    %21 = vector.broadcast %20 : vector<1x8xf32> to vector<16x8xf32>
    %22 = arith.addf %19, %21 : vector<16x8xf32>
    %23 = math.tanh %22 : vector<16x8xf32>
    %c0_17 = arith.constant 0 : index
    %c0_18 = arith.constant 0 : index
    %24 = vector.load %arg8[%c0_17, %c0_18] : memref<16x8xf32, #tpu.memory_space<vmem>>, vector<16x8xf32>
    tpu.vector_store %arg8[%c0_17, %c0_18], %23 {strides = array<i32>} : memref<16x8xf32, #tpu.memory_space<vmem>>, vector<16x8xf32>,
    return
  }
  func.func @transform_0(%arg0: i32) -> (i32, i32) {
    %c0_i32 = arith.constant 0 : i32
    %c0_i32_0 = arith.constant 0 : i32
    return %arg0, %c0_i32 : i32, i32
  }
  func.func @transform_1(%arg0: i32) -> (i32, i32) {
    %c0_i32 = arith.constant 0 : i32
    %c0_i32_0 = arith.constant 0 : i32
    %c0_i32_1 = arith.constant 0 : i32
    return %c0_i32, %c0_i32_0 : i32, i32
  }
  func.func @transform_2(%arg0: i32) -> (i32, i32) {
    %c0_i32 = arith.constant 0 : i32
    %c0_i32_0 = arith.constant 0 : i32
    %c0_i32_1 = arith.constant 0 : i32
    return %c0_i32, %c0_i32_0 : i32, i32
  }
  func.func @transform_3(%arg0: i32) -> (i32, i32) {
    %c0_i32 = arith.constant 0 : i32
    %c0_i32_0 = arith.constant 0 : i32
    %c0_i32_1 = arith.constant 0 : i32
    return %c0_i32, %c0_i32_0 : i32, i32
  }
  func.func @transform_4(%arg0: i32) -> (i32, i32) {
    %c0_i32 = arith.constant 0 : i32
    %c0_i32_0 = arith.constant 0 : i32
    %c0_i32_1 = arith.constant 0 : i32
    return %c0_i32, %c0_i32_0 : i32, i32
  }
  func.func @transform_5(%arg0: i32) -> (i32, i32) {
    %c0_i32 = arith.constant 0 : i32
    %c0_i32_0 = arith.constant 0 : i32
    %c0_i32_1 = arith.constant 0 : i32
    return %c0_i32, %c0_i32_0 : i32, i32
  }
  func.func @transform_6(%arg0: i32) -> (i32, i32) {
    %c0_i32 = arith.constant 0 : i32
    %c0_i32_0 = arith.constant 0 : i32
    %c0_i32_1 = arith.constant 0 : i32
    return %c0_i32, %c0_i32_0 : i32, i32
  }
  func.func @transform_7(%arg0: i32) -> (i32, i32) {
    %c0_i32 = arith.constant 0 : i32
    %c0_i32_0 = arith.constant 0 : i32
    return %arg0, %c0_i32 : i32, i32
  }
}

</mosaic_0001>

<llo_original>
// kernel: tpu_custom_call.1
$region0: #{tpu_custom_call.1}
  #allocation0 [shape = 'u32[]', space=smem, size = 0x4, offset = 0x4, fixed_abs, tag = 'smem constant byte address 0x4 - core index']
  #allocation1 [shape = 'u32[72,128]{1,0:T(1,128)}', space=vmem, size = 0x9000, scoped, tag = 'internal scratch']
  %s0 = inlined_call_operand.vmem [shape: f32[8,14], index: 0, kind: input, shape index: {}]
  %s1 = inlined_call_operand.vmem [shape: bf16[14,256], index: 1, kind: input, shape index: {}]
  %s2 = inlined_call_operand.vmem [shape: f32[1,256], index: 2, kind: input, shape index: {}]
  %s3 = inlined_call_operand.hbm [shape: bf16[256,256], index: 3, kind: input, shape index: {}]
  %s4 = inlined_call_operand.vmem [shape: f32[1,256], index: 4, kind: input, shape index: {}]
  %s5 = inlined_call_operand.vmem [shape: bf16[256,8], index: 5, kind: input, shape index: {}]
  %s6 = inlined_call_operand.vmem [shape: f32[1,8], index: 6, kind: input, shape index: {}]
  %s7 = inlined_call_operand.hbm [shape: f32[8,8], index: 7, kind: output, shape index: {}]
  %s8 = sld [smem:[#allocation0]]
  $region42: #{tpu_custom_call.1} parent=0
    _
  %s10 = ssub.s32 1, %s8
  %s11 = scalar_select 0, %s10, %s8
  $region1: #{tpu_custom_call.1} parent=0
    #allocation2 [shape = 'u8[131072]{0}', space=vmem, size = 0x20000, scoped, tag = 'input window, operand 3, single buffered']
    #allocation3 [shape = 's32[1]{0}', space=sflag, size = 0x4, scoped, tag = 'scoped memory for tpu_custom_call.1']
    #allocation4 [shape = 's32[1]{0}', space=sflag, size = 0x4, scoped, tag = 'scoped memory for tpu_custom_call.1']
    #allocation5 [shape = 'u8[8192]{0}', space=vmem, size = 0x2000, scoped, tag = 'output window, operand 0, single buffered']
    %12 = vsyncpa [#allocation3], 0
    %13 = vsyncpa [#allocation4], 0
    // Predicated region
    $region2: #{tpu_custom_call.1} parent=1 // pred_check
      _
    $region3: #{tpu_custom_call.1} parent=1 // pred_check_branch
      %15 = sbr.rel (0) target = $region5
    $region4: #{tpu_custom_call.1} parent=1 // pred_region
      _
    $region5: #{tpu_custom_call.1} parent=1 // pred_fallthru
      _
    // Predicated region
    $region6: #{tpu_custom_call.1} parent=1 // pred_check
      _
    $region7: #{tpu_custom_call.1} parent=1 // pred_check_branch
      %17 = sbr.rel (0) target = $region9
    $region8: #{tpu_custom_call.1} parent=1 // pred_region
      _
    $region9: #{tpu_custom_call.1} parent=1 // pred_fallthru
      _
    // Predicated region
    $region10: #{tpu_custom_call.1} parent=1 // pred_check
      _
    $region11: #{tpu_custom_call.1} parent=1 // pred_check_branch
      %19 = sbr.rel (0) target = $region13
    $region12: #{tpu_custom_call.1} parent=1 // pred_region
      _
    $region13: #{tpu_custom_call.1} parent=1 // pred_fallthru
      _
    // Predicated region
    $region14: #{tpu_custom_call.1} parent=1 // pred_check
      _
    $region15: #{tpu_custom_call.1} parent=1 // pred_check_branch
      %21 = sbr.rel (0) target = $region17
    $region16: #{tpu_custom_call.1} parent=1 // pred_region
      %23 = vsyncadd [#allocation3], 0
      %s24 = sshll.u32 %s3, 4
      %s25 = int_to_ptr.hbm [resolvable:$true] %s24
      %s26 = sshll.u32 [#allocation2], 4
      %s27 = int_to_ptr.vmem [resolvable:$true] %s26
      %32 = dma.hbm_to_vmem [thread:$0]  %s25, 4096, %s27, [#allocation3], 128, 128, 8
    $region17: #{tpu_custom_call.1} parent=1 // pred_fallthru
      _
    // Predicated region
    $region18: #{tpu_custom_call.1} parent=1 // pred_check
      _
    $region19: #{tpu_custom_call.1} parent=1 // pred_check_branch
      %34 = sbr.rel (0) target = $region21
    $region20: #{tpu_custom_call.1} parent=1 // pred_region
      _
    $region21: #{tpu_custom_call.1} parent=1 // pred_fallthru
      _
    // Predicated region
    $region22: #{tpu_custom_call.1} parent=1 // pred_check
      _
    $region23: #{tpu_custom_call.1} parent=1 // pred_check_branch
      %36 = sbr.rel (0) target = $region25
    $region24: #{tpu_custom_call.1} parent=1 // pred_region
      _
    $region25: #{tpu_custom_call.1} parent=1 // pred_fallthru
      _
    // Predicated region
    $region26: #{tpu_custom_call.1} parent=1 // pred_check
      _
    $region27: #{tpu_custom_call.1} parent=1 // pred_check_branch
      %38 = sbr.rel (0) target = $region29
    $region28: #{tpu_custom_call.1} parent=1 // pred_region
      _
    $region29: #{tpu_custom_call.1} parent=1 // pred_fallthru
      _
    // Predicated region
    $region30: #{tpu_custom_call.1} parent=1 // pred_check
      _
    $region31: #{tpu_custom_call.1} parent=1 // pred_check_branch
      %40 = sbr.rel (0) target = $region33
    $region32: #{tpu_custom_call.1} parent=1 // pred_region
      %42 = dma.done [#allocation3], 4096
    $region33: #{tpu_custom_call.1} parent=1 // pred_fallthru
      _
    %v44 = vld [vmem:[%s0] sm:$0xff]
    %v45 = vld [vmem:[%s0 + $0x8] sm:$0xff]
    %v46 = vpack.c.bf16 %v45, %v44
    %v47 = vld [vmem:[%s1] sm:$0xff]
    %v48 = vld [vmem:[%s1 + $0x8] sm:$0x77]
    %v49 = vld [vmem:[%s2] sm:$0x3]
    %v51 = vperm.slane %v49, 0
    %v52 = vperm.slane %v49, 1
    %v57 = vunpack.c.l.b16 %v47
    %v58 = vunpack.c.h.b16 %v47
    %v59 = vunpack.c.l.b16 %v48
    %v60 = vunpack.c.h.b16 %v48
    %v61 = vpack.c.b16 %v59, %v57
    %v62 = vpack.c.b16 %v60, %v58
    %vm63 = vcmask 113664
    %v65 = vsel %vm63, %v46, 0
    %vm67 = vcmask 1046528
    %v69 = vsel %vm67, %v61, 0
    %v72 = vsel %vm67, %v62, 0
    %74 = vmatpush.bf16.msra.mxu0 0
    %75 = vmatpush.bf16.msra.mxu0 0
    %76 = vmatpush.bf16.msra.mxu0 0
    %77 = vmatpush.bf16.msra.mxu0 0
    %78 = vmatpush.bf16.msra.mxu0 0
    %79 = vmatpush.bf16.msra.mxu0 0
    %80 = vmatpush.bf16.msra.mxu0 0
    %81 = vmatpush.bf16.msra.mxu0 %v69
    %82 = vmatmul.bf16.gmra.mxu0 %v65
    %v83 = vpop.f32.mrf.mxu0
    %v84 = vadd.f32 %v51, %v83
    %v85 = vpop.f32.mrf.mxu0
    %v86 = vadd.f32 %v51, %v85
    %87 = vdwg.mxu0
    %88 = vmatpush.bf16.msra.mxu0 0
    %89 = vmatpush.bf16.msra.mxu0 0
    %90 = vmatpush.bf16.msra.mxu0 0
    %91 = vmatpush.bf16.msra.mxu0 0
    %92 = vmatpush.bf16.msra.mxu0 0
    %93 = vmatpush.bf16.msra.mxu0 0
    %94 = vmatpush.bf16.msra.mxu0 0
    %95 = vmatpush.bf16.msra.mxu0 %v72
    %96 = vmatmul.bf16.gmra.mxu0 %v65
    %v97 = vpop.f32.mrf.mxu0
    %v98 = vadd.f32 %v52, %v97
    %v99 = vpop.f32.mrf.mxu0
    %v100 = vadd.f32 %v52, %v99
    %101 = vdwg.mxu0
    %v102 = vmax.f32 %v84, 0.0
    %v103 = vmax.f32 %v98, 0.0
    %v104 = vmax.f32 %v86, 0.0
    %v105 = vmax.f32 %v100, 0.0
    %v106 = vpack.c.bf16 %v104, %v102
    %v107 = vpack.c.bf16 %v105, %v103
    %v108 = vld [vmem:[#allocation2] sm:$0xff]
    %v109 = vld [vmem:[#allocation2 + $0x8] sm:$0xff]
    %v110 = vld [vmem:[#allocation2 + $0x10] sm:$0xff]
    %v111 = vld [vmem:[#allocation2 + $0x18] sm:$0xff]
    %v112 = vld [vmem:[#allocation2 + $0x20] sm:$0xff]
    %v113 = vld [vmem:[#allocation2 + $0x28] sm:$0xff]
    %v114 = vld [vmem:[#allocation2 + $0x30] sm:$0xff]
    %v115 = vld [vmem:[#allocation2 + $0x38] sm:$0xff]
    %v116 = vld [vmem:[#allocation2 + $0x40] sm:$0xff]
    %v117 = vld [vmem:[#allocation2 + $0x48] sm:$0xff]
    %v118 = vld [vmem:[#allocation2 + $0x50] sm:$0xff]
    %v119 = vld [vmem:[#allocation2 + $0x58] sm:$0xff]
    %v120 = vld [vmem:[#allocation2 + $0x60] sm:$0xff]
    %v121 = vld [vmem:[#allocation2 + $0x68] sm:$0xff]
    %v122 = vld [vmem:[#allocation2 + $0x70] sm:$0xff]
    %v123 = vld [vmem:[#allocation2 + $0x78] sm:$0xff]
    %v124 = vld [vmem:[#allocation2 + $0x80] sm:$0xff]
    %v125 = vld [vmem:[#allocation2 + $0x88] sm:$0xff]
    %v126 = vld [vmem:[#allocation2 + $0x90] sm:$0xff]
    %v127 = vld [vmem:[#allocation2 + $0x98] sm:$0xff]
    %v128 = vld [vmem:[#allocation2 + $0xa0] sm:$0xff]
    %v129 = vld [vmem:[#allocation2 + $0xa8] sm:$0xff]
    %v130 = vld [vmem:[#allocation2 + $0xb0] sm:$0xff]
    %v131 = vld [vmem:[#allocation2 + $0xb8] sm:$0xff]
    %v132 = vld [vmem:[#allocation2 + $0xc0] sm:$0xff]
    %v133 = vld [vmem:[#allocation2 + $0xc8] sm:$0xff]
    %v134 = vld [vmem:[#allocation2 + $0xd0] sm:$0xff]
    %v135 = vld [vmem:[#allocation2 + $0xd8] sm:$0xff]
    %v136 = vld [vmem:[#allocation2 + $0xe0] sm:$0xff]
    %v137 = vld [vmem:[#allocation2 + $0xe8] sm:$0xff]
    %v138 = vld [vmem:[#allocation2 + $0xf0] sm:$0xff]
    %v139 = vld [vmem:[#allocation2 + $0xf8] sm:$0xff]
    %v140 = vld [vmem:[%s4] sm:$0x3]
    %v142 = vperm.slane %v140, 0
    %v143 = vperm.slane %v140, 1
    %v178 = vunpack.c.l.b16 %v108
    %v179 = vunpack.c.h.b16 %v108
    %v180 = vunpack.c.l.b16 %v109
    %v181 = vunpack.c.h.b16 %v109
    %v182 = vunpack.c.l.b16 %v110
    %v183 = vunpack.c.h.b16 %v110
    %v184 = vunpack.c.l.b16 %v111
    %v185 = vunpack.c.h.b16 %v111
    %v186 = vunpack.c.l.b16 %v112
    %v187 = vunpack.c.h.b16 %v112
    %v188 = vunpack.c.l.b16 %v113
    %v189 = vunpack.c.h.b16 %v113
    %v190 = vunpack.c.l.b16 %v114
    %v191 = vunpack.c.h.b16 %v114
    %v192 = vunpack.c.l.b16 %v115
    %v193 = vunpack.c.h.b16 %v115
    %v194 = vunpack.c.l.b16 %v116
    %v195 = vunpack.c.h.b16 %v116
    %v196 = vunpack.c.l.b16 %v117
    %v197 = vunpack.c.h.b16 %v117
    %v198 = vunpack.c.l.b16 %v118
    %v199 = vunpack.c.h.b16 %v118
    %v200 = vunpack.c.l.b16 %v119
    %v201 = vunpack.c.h.b16 %v119
    %v202 = vunpack.c.l.b16 %v120
    %v203 = vunpack.c.h.b16 %v120
    %v204 = vunpack.c.l.b16 %v121
    %v205 = vunpack.c.h.b16 %v121
    %v206 = vunpack.c.l.b16 %v122
    %v207 = vunpack.c.h.b16 %v122
    %v208 = vunpack.c.l.b16 %v123
    %v209 = vunpack.c.h.b16 %v123
    %v210 = vunpack.c.l.b16 %v124
    %v211 = vunpack.c.h.b16 %v124
    %v212 = vunpack.c.l.b16 %v125
    %v213 = vunpack.c.h.b16 %v125
    %v214 = vunpack.c.l.b16 %v126
    %v215 = vunpack.c.h.b16 %v126
    %v216 = vunpack.c.l.b16 %v127
    %v217 = vunpack.c.h.b16 %v127
    %v218 = vunpack.c.l.b16 %v128
    %v219 = vunpack.c.h.b16 %v128
    %v220 = vunpack.c.l.b16 %v129
    %v221 = vunpack.c.h.b16 %v129
    %v222 = vunpack.c.l.b16 %v130
    %v223 = vunpack.c.h.b16 %v130
    %v224 = vunpack.c.l.b16 %v131
    %v225 = vunpack.c.h.b16 %v131
    %v226 = vunpack.c.l.b16 %v132
    %v227 = vunpack.c.h.b16 %v132
    %v228 = vunpack.c.l.b16 %v133
    %v229 = vunpack.c.h.b16 %v133
    %v230 = vunpack.c.l.b16 %v134
    %v231 = vunpack.c.h.b16 %v134
    %v232 = vunpack.c.l.b16 %v135
    %v233 = vunpack.c.h.b16 %v135
    %v234 = vunpack.c.l.b16 %v136
    %v235 = vunpack.c.h.b16 %v136
    %v236 = vunpack.c.l.b16 %v137
    %v237 = vunpack.c.h.b16 %v137
    %v238 = vunpack.c.l.b16 %v138
    %v239 = vunpack.c.h.b16 %v138
    %v240 = vunpack.c.l.b16 %v139
    %v241 = vunpack.c.h.b16 %v139
    %v242 = vpack.c.b16 %v180, %v178
    %v243 = vpack.c.b16 %v181, %v179
    %v244 = vpack.c.b16 %v184, %v182
    %v245 = vpack.c.b16 %v185, %v183
    %v246 = vpack.c.b16 %v188, %v186
    %v247 = vpack.c.b16 %v189, %v187
    %v248 = vpack.c.b16 %v192, %v190
    %v249 = vpack.c.b16 %v193, %v191
    %v250 = vpack.c.b16 %v196, %v194
    %v251 = vpack.c.b16 %v197, %v195
    %v252 = vpack.c.b16 %v200, %v198
    %v253 = vpack.c.b16 %v201, %v199
    %v254 = vpack.c.b16 %v204, %v202
    %v255 = vpack.c.b16 %v205, %v203
    %v256 = vpack.c.b16 %v208, %v206
    %v257 = vpack.c.b16 %v209, %v207
    %v258 = vpack.c.b16 %v212, %v210
    %v259 = vpack.c.b16 %v213, %v211
    %v260 = vpack.c.b16 %v216, %v214
    %v261 = vpack.c.b16 %v217, %v215
    %v262 = vpack.c.b16 %v220, %v218
    %v263 = vpack.c.b16 %v221, %v219
    %v264 = vpack.c.b16 %v224, %v222
    %v265 = vpack.c.b16 %v225, %v223
    %v266 = vpack.c.b16 %v228, %v226
    %v267 = vpack.c.b16 %v229, %v227
    %v268 = vpack.c.b16 %v232, %v230
    %v269 = vpack.c.b16 %v233, %v231
    %v270 = vpack.c.b16 %v236, %v234
    %v271 = vpack.c.b16 %v237, %v235
    %v272 = vpack.c.b16 %v240, %v238
    %v273 = vpack.c.b16 %v241, %v239
    %306 = vmatpush.bf16.msra.mxu0 %v256
    %307 = vmatpush.bf16.msra.mxu0 %v254
    %308 = vmatpush.bf16.msra.mxu0 %v252
    %309 = vmatpush.bf16.msra.mxu0 %v250
    %310 = vmatpush.bf16.msra.mxu0 %v248
    %311 = vmatpush.bf16.msra.mxu0 %v246
    %312 = vmatpush.bf16.msra.mxu0 %v244
    %313 = vmatpush.bf16.msra.mxu0 %v242
    %314 = vmatmul.bf16.gmra.mxu0 %v106
    %v315 = vpop.f32.mrf.mxu0
    %v316 = vadd.f32 %v142, %v315
    %v317 = vpop.f32.mrf.mxu0
    %v318 = vadd.f32 %v142, %v317
    %319 = vdwg.mxu0
    %320 = vmatpush.bf16.msra.mxu0 %v272
    %321 = vmatpush.bf16.msra.mxu0 %v270
    %322 = vmatpush.bf16.msra.mxu0 %v268
    %323 = vmatpush.bf16.msra.mxu0 %v266
    %324 = vmatpush.bf16.msra.mxu0 %v264
    %325 = vmatpush.bf16.msra.mxu0 %v262
    %326 = vmatpush.bf16.msra.mxu0 %v260
    %327 = vmatpush.bf16.msra.mxu0 %v258
    %328 = vmatmul.bf16.gmra.mxu0 %v107
    %v329 = vpop.f32.mrf.mxu0
    %v330 = vadd.f32 %v316, %v329
    %v331 = vpop.f32.mrf.mxu0
    %v332 = vadd.f32 %v318, %v331
    %333 = vdwg.mxu0
    %334 = vmatpush.bf16.msra.mxu0 %v257
    %335 = vmatpush.bf16.msra.mxu0 %v255
    %336 = vmatpush.bf16.msra.mxu0 %v253
    %337 = vmatpush.bf16.msra.mxu0 %v251
    %338 = vmatpush.bf16.msra.mxu0 %v249
    %339 = vmatpush.bf16.msra.mxu0 %v247
    %340 = vmatpush.bf16.msra.mxu0 %v245
    %341 = vmatpush.bf16.msra.mxu0 %v243
    %342 = vmatmul.bf16.gmra.mxu0 %v106
    %v343 = vpop.f32.mrf.mxu0
    %v344 = vadd.f32 %v143, %v343
    %v345 = vpop.f32.mrf.mxu0
    %v346 = vadd.f32 %v143, %v345
    %347 = vdwg.mxu0
    %348 = vmatpush.bf16.msra.mxu0 %v273
    %349 = vmatpush.bf16.msra.mxu0 %v271
    %350 = vmatpush.bf16.msra.mxu0 %v269
    %351 = vmatpush.bf16.msra.mxu0 %v267
    %352 = vmatpush.bf16.msra.mxu0 %v265
    %353 = vmatpush.bf16.msra.mxu0 %v263
    %354 = vmatpush.bf16.msra.mxu0 %v261
    %355 = vmatpush.bf16.msra.mxu0 %v259
    %356 = vmatmul.bf16.gmra.mxu0 %v107
    %v357 = vpop.f32.mrf.mxu0
    %v358 = vadd.f32 %v344, %v357
    %v359 = vpop.f32.mrf.mxu0
    %v360 = vadd.f32 %v346, %v359
    %361 = vdwg.mxu0
    %v362 = vmax.f32 %v330, 0.0
    %v363 = vmax.f32 %v358, 0.0
    %v364 = vmax.f32 %v332, 0.0
    %v365 = vmax.f32 %v360, 0.0
    %v366 = vpack.c.bf16 %v364, %v362
    %v367 = vpack.c.bf16 %v365, %v363
    %v368 = vld [vmem:[%s5] sm:$0xf]
    %v369 = vld [vmem:[%s5 + $0x4] sm:$0xf]
    %v370 = vld [vmem:[%s5 + $0x8] sm:$0xf]
    %v371 = vld [vmem:[%s5 + $0xc] sm:$0xf]
    %v372 = vld [vmem:[%s5 + $0x10] sm:$0xf]
    %v373 = vld [vmem:[%s5 + $0x14] sm:$0xf]
    %v374 = vld [vmem:[%s5 + $0x18] sm:$0xf]
    %v375 = vld [vmem:[%s5 + $0x1c] sm:$0xf]
    %v376 = vld [vmem:[%s5 + $0x20] sm:$0xf]
    %v377 = vld [vmem:[%s5 + $0x24] sm:$0xf]
    %v378 = vld [vmem:[%s5 + $0x28] sm:$0xf]
    %v379 = vld [vmem:[%s5 + $0x2c] sm:$0xf]
    %v380 = vld [vmem:[%s5 + $0x30] sm:$0xf]
    %v381 = vld [vmem:[%s5 + $0x34] sm:$0xf]
    %v382 = vld [vmem:[%s5 + $0x38] sm:$0xf]
    %v383 = vld [vmem:[%s5 + $0x3c] sm:$0xf]
    %v384 = vld [vmem:[%s5 + $0x40] sm:$0xf]
    %v385 = vld [vmem:[%s5 + $0x44] sm:$0xf]
    %v386 = vld [vmem:[%s5 + $0x48] sm:$0xf]
    %v387 = vld [vmem:[%s5 + $0x4c] sm:$0xf]
    %v388 = vld [vmem:[%s5 + $0x50] sm:$0xf]
    %v389 = vld [vmem:[%s5 + $0x54] sm:$0xf]
    %v390 = vld [vmem:[%s5 + $0x58] sm:$0xf]
    %v391 = vld [vmem:[%s5 + $0x5c] sm:$0xf]
    %v392 = vld [vmem:[%s5 + $0x60] sm:$0xf]
    %v393 = vld [vmem:[%s5 + $0x64] sm:$0xf]
    %v394 = vld [vmem:[%s5 + $0x68] sm:$0xf]
    %v395 = vld [vmem:[%s5 + $0x6c] sm:$0xf]
    %v396 = vld [vmem:[%s5 + $0x70] sm:$0xf]
    %v397 = vld [vmem:[%s5 + $0x74] sm:$0xf]
    %v398 = vld [vmem:[%s5 + $0x78] sm:$0xf]
    %v399 = vld [vmem:[%s5 + $0x7c] sm:$0xf]
    %v400 = vld [vmem:[%s6] sm:$0x1]
    %v402 = vperm.slane %v400, 0
    %v436 = vunpack.c.l.b16 %v368
    %v437 = vunpack.c.l.b16 %v369
    %v438 = vunpack.c.l.b16 %v370
    %v439 = vunpack.c.l.b16 %v371
    %v440 = vunpack.c.l.b16 %v372
    %v441 = vunpack.c.l.b16 %v373
    %v442 = vunpack.c.l.b16 %v374
    %v443 = vunpack.c.l.b16 %v375
    %v444 = vunpack.c.l.b16 %v376
    %v445 = vunpack.c.l.b16 %v377
    %v446 = vunpack.c.l.b16 %v378
    %v447 = vunpack.c.l.b16 %v379
    %v448 = vunpack.c.l.b16 %v380
    %v449 = vunpack.c.l.b16 %v381
    %v450 = vunpack.c.l.b16 %v382
    %v451 = vunpack.c.l.b16 %v383
    %v452 = vunpack.c.l.b16 %v384
    %v453 = vunpack.c.l.b16 %v385
    %v454 = vunpack.c.l.b16 %v386
    %v455 = vunpack.c.l.b16 %v387
    %v456 = vunpack.c.l.b16 %v388
    %v457 = vunpack.c.l.b16 %v389
    %v458 = vunpack.c.l.b16 %v390
    %v459 = vunpack.c.l.b16 %v391
    %v460 = vunpack.c.l.b16 %v392
    %v461 = vunpack.c.l.b16 %v393
    %v462 = vunpack.c.l.b16 %v394
    %v463 = vunpack.c.l.b16 %v395
    %v464 = vunpack.c.l.b16 %v396
    %v465 = vunpack.c.l.b16 %v397
    %v466 = vunpack.c.l.b16 %v398
    %v467 = vunpack.c.l.b16 %v399
    %v468 = vpack.c.b16 %v437, %v436
    %v469 = vpack.c.b16 %v439, %v438
    %v470 = vpack.c.b16 %v441, %v440
    %v471 = vpack.c.b16 %v443, %v442
    %v472 = vpack.c.b16 %v445, %v444
    %v473 = vpack.c.b16 %v447, %v446
    %v474 = vpack.c.b16 %v449, %v448
    %v475 = vpack.c.b16 %v451, %v450
    %v476 = vpack.c.b16 %v453, %v452
    %v477 = vpack.c.b16 %v455, %v454
    %v478 = vpack.c.b16 %v457, %v456
    %v479 = vpack.c.b16 %v459, %v458
    %v480 = vpack.c.b16 %v461, %v460
    %v481 = vpack.c.b16 %v463, %v462
    %v482 = vpack.c.b16 %v465, %v464
    %v483 = vpack.c.b16 %v467, %v466
    %500 = vmatpush.bf16.msra.mxu0 %v475
    %501 = vmatpush.bf16.msra.mxu0 %v474
    %502 = vmatpush.bf16.msra.mxu0 %v473
    %503 = vmatpush.bf16.msra.mxu0 %v472
    %504 = vmatpush.bf16.msra.mxu0 %v471
    %505 = vmatpush.bf16.msra.mxu0 %v470
    %506 = vmatpush.bf16.msra.mxu0 %v469
    %507 = vmatpush.bf16.msra.mxu0 %v468
    %508 = vmatmul.bf16.gmra.mxu0 %v366
    %v509 = vpop.f32.mrf.mxu0
    %v510 = vadd.f32 %v402, %v509
    %v511 = vpop.f32.mrf.mxu0
    %v512 = vadd.f32 %v402, %v511
    %513 = vdwg.mxu0
    %514 = vmatpush.bf16.msra.mxu0 %v483
    %515 = vmatpush.bf16.msra.mxu0 %v482
    %516 = vmatpush.bf16.msra.mxu0 %v481
    %517 = vmatpush.bf16.msra.mxu0 %v480
    %518 = vmatpush.bf16.msra.mxu0 %v479
    %519 = vmatpush.bf16.msra.mxu0 %v478
    %520 = vmatpush.bf16.msra.mxu0 %v477
    %521 = vmatpush.bf16.msra.mxu0 %v476
    %522 = vmatmul.bf16.gmra.mxu0 %v367
    %v523 = vpop.f32.mrf.mxu0
    %v524 = vadd.f32 %v510, %v523
    %v525 = vpop.f32.mrf.mxu0
    %v526 = vadd.f32 %v512, %v525
    %527 = vdwg.mxu0
    %v528 = vtanh.pop %v524
    %v529 = vtanh.pop %v526
    %vm530 = vcmask 64512
    %531 = vst.msk [vmem:[#allocation5] sm:$0xff] %vm530, %v528
    %532 = vst.msk [vmem:[#allocation5 + $0x8] sm:$0xff] %vm530, %v529
    // Predicated region
    $region34: #{tpu_custom_call.1} parent=1 // pred_check
      _
    $region35: #{tpu_custom_call.1} parent=1 // pred_check_branch
      %534 = sbr.rel (0) target = $region37
    $region36: #{tpu_custom_call.1} parent=1 // pred_region
      %536 = vsyncadd [#allocation4], 128
      %s537 = sshll.u32 [#allocation5], 4
      %s538 = int_to_ptr.vmem [resolvable:$true] %s537
      %s539 = sshll.u32 %s7, 4
      %s540 = int_to_ptr.hbm [resolvable:$true] %s539
      %545 = dma.vmem_to_hbm [thread:$0]  %s538, 128, %s540, [#allocation4], 128, 128, 8
    $region37: #{tpu_custom_call.1} parent=1 // pred_fallthru
      _
    // Predicated region
    $region38: #{tpu_custom_call.1} parent=1 // pred_check
      _
    $region39: #{tpu_custom_call.1} parent=1 // pred_check_branch
      %547 = sbr.rel (0) target = $region41
    $region40: #{tpu_custom_call.1} parent=1 // pred_region
      %549 = dma.done [#allocation4], 256
    $region41: #{tpu_custom_call.1} parent=1 // pred_fallthru
      _
    %550 = vsyncpa [#allocation3], 1
    %551 = vsyncpa [#allocation4], 1

</llo_original>
